<compile_context>
chip_gen: v7x
topology: tpu7x:2x2x1
jax: 0.10.0
libtpu: 0.0.40
codegen_flags: <defaults>
</compile_context>

<pallas_src>
import functools

import jax
import jax.numpy as jnp
from jax.experimental import pallas as pl
from jax.experimental.pallas import tpu as pltpu


def _round_up(x, m):
    return ((x + m - 1) // m) * m


def _temporal_block_kernel(K, d, p, p_al, TL, use_bf16,
                           x_ref, w1_ref, b1_ref, w2_ref, b2_ref,
                           wd_ref, bd_ref, slopes_ref, out_ref, y_ref):
    """One (batch-tile, L-tile) block per grid step.

    x_ref   : (NB, TW, Cin_p)      TW = TL + 2*p_al, halo'd + zero-padded input window
    w1_ref  : (K*Cin_p, Cout_p)    conv1 weight, taps folded into the contraction dim
    w2_ref  : (K*Cout_p, Cout_p)
    wd_ref  : (Cin_p, Cout_p)      1x1 downsample conv weight
    b*_ref  : (1, Cout_p)          biases (f32)
    slopes_ref : (3,) in SMEM      PReLU slopes (a1, a2, a3)
    out_ref, y_ref : (NB, TL, Cout_p)
    """
    NB, TW, Cin_p = x_ref.shape
    Cout_p = out_ref.shape[-1]
    TLh = TL + p_al            # conv1 rows = output tile + causal halo needed by conv2
    off = p_al - p             # alignment slack of the (sublane-aligned) halo
    l = pl.program_id(1)

    mm_dtype = jnp.bfloat16 if use_bf16 else jnp.float32
    a1 = slopes_ref[0]
    a2 = slopes_ref[1]
    a3 = slopes_ref[2]

    # ---- conv1: single matmul, contraction depth K*Cin_p ----
    taps = [x_ref[:, off + k * d: off + k * d + TLh, :] for k in range(K)]
    x1 = jnp.concatenate(taps, axis=-1).reshape(NB * TLh, K * Cin_p)
    h1 = jnp.dot(x1.astype(mm_dtype), w1_ref[...],
                 preferred_element_type=jnp.float32) + b1_ref[...]
    h1 = jnp.where(h1 >= 0.0, h1, a1 * h1)                     # PReLU 1 (dropout = id)
    h1 = h1.reshape(NB, TLh, Cout_p)
    # Halo rows whose global position is < 0 are conv2's ZERO left padding (not conv1(0)+b1).
    j = jax.lax.broadcasted_iota(jnp.int32, (NB, TLh, 1), 1)
    h1 = jnp.where(l * TL - p_al + j >= 0, h1, 0.0)

    # ---- conv2: single matmul, contraction depth K*Cout_p ----
    taps2 = [h1[:, off + k * d: off + k * d + TL, :] for k in range(K)]
    h2 = jnp.concatenate(taps2, axis=-1).reshape(NB * TL, K * Cout_p)
    out = jnp.dot(h2.astype(mm_dtype), w2_ref[...],
                  preferred_element_type=jnp.float32) + b2_ref[...]
    out = jnp.where(out >= 0.0, out, a2 * out)                  # PReLU 2 (dropout = id)

    # ---- residual 1x1 conv: reuse last conv1 tap (its rows [p_al:] are this tile's x) ----
    xr = taps[K - 1][:, p_al:, :].reshape(NB * TL, Cin_p)
    res = jnp.dot(xr.astype(mm_dtype), wd_ref[...],
                  preferred_element_type=jnp.float32) + bd_ref[...]

    y = out + res
    y = jnp.where(y >= 0.0, y, a3 * y)                          # final PReLU

    out_ref[...] = out.reshape(NB, TL, Cout_p)
    y_ref[...] = y.reshape(NB, TL, Cout_p)


def temporal_block_forward(x_ncl, params, *, kernel_size, dilation, use_bf16=False):
    """x_ncl: (N, Cin, L) float32 (PyTorch Conv1d layout).

    Returns (out, PReLU(out + res)), both (N, Cout, L).
    Set use_bf16=True on v6e/v7x for bf16 MXU inputs (f32 accumulation).
    """
    N, Cin, L = x_ncl.shape
    K, d = kernel_size, dilation
    Cout = params["w1"].shape[2]
    p = (K - 1) * d
    p_al = _round_up(p, 8)                 # sublane-aligned causal halo

    LANE, SUB = 128, 8
    Cin_p = _round_up(Cin, LANE)
    Cout_p = _round_up(Cout, LANE)
    mm_dtype = jnp.bfloat16 if use_bf16 else jnp.float32

    # L tiling: <= 512 rows per tile (multiple of 8) -> bounded VMEM for long sequences.
    n_lt = -(-L // 512)
    TL = _round_up(-(-L // n_lt), SUB)
    L_pad = TL * n_lt
    TW = TL + 2 * p_al                     # halo'd input window per tile

    # Batch tiling: pack samples so each matmul sees ~512 rows (amortize MXU push/drain).
    NB = min(N, max(1, 512 // TL))
    G_n = -(-N // NB)
    N_pad = G_n * NB

    # ---- layout prep: channels-last, zero-padded, overlapping (halo'd) L tiles ----
    x_nlc = jnp.transpose(x_ncl, (0, 2, 1)).astype(jnp.float32)
    x_p = jnp.pad(x_nlc, ((0, N_pad - N), (2 * p_al, L_pad - L), (0, Cin_p - Cin)))
    idx = (jnp.arange(n_lt) * TL)[:, None] + jnp.arange(TW)[None, :]
    x_tiles = x_p[:, idx, :]                                  # (N_pad, n_lt, TW, Cin_p)

    def pad_w(w, ci, cip):                 # (K, ci, Cout) -> (K*cip, Cout_p), matmul dtype
        wp = jnp.pad(w, ((0, 0), (0, cip - ci), (0, Cout_p - Cout)))
        return wp.reshape(w.shape[0] * cip, Cout_p).astype(mm_dtype)

    w1 = pad_w(params["w1"], Cin, Cin_p)
    w2 = pad_w(params["w2"], Cout, Cout_p)
    wd = jnp.pad(params["wd"],
                 ((0, Cin_p - Cin), (0, Cout_p - Cout))).astype(mm_dtype)
    b1 = jnp.pad(params["b1"], (0, Cout_p - Cout)).reshape(1, Cout_p).astype(jnp.float32)
    b2 = jnp.pad(params["b2"], (0, Cout_p - Cout)).reshape(1, Cout_p).astype(jnp.float32)
    bd = jnp.pad(params["bd"], (0, Cout_p - Cout)).reshape(1, Cout_p).astype(jnp.float32)
    slopes = jnp.stack([params["a1"], params["a2"], params["a3"]]).astype(jnp.float32)

    kernel = functools.partial(_temporal_block_kernel, K, d, p, p_al, TL, use_bf16)

    out_p, y_p = pl.pallas_call(
        kernel,
        out_shape=[jax.ShapeDtypeStruct((N_pad, L_pad, Cout_p), jnp.float32),
                   jax.ShapeDtypeStruct((N_pad, L_pad, Cout_p), jnp.float32)],
        grid=(G_n, n_lt),
        in_specs=[
            pl.BlockSpec((NB, None, TW, Cin_p), lambda n, l: (n, l, 0, 0)),  # x tiles
            pl.BlockSpec((K * Cin_p, Cout_p), lambda n, l: (0, 0)),          # w1 (resident)
            pl.BlockSpec((1, Cout_p), lambda n, l: (0, 0)),                  # b1
            pl.BlockSpec((K * Cout_p, Cout_p), lambda n, l: (0, 0)),         # w2 (resident)
            pl.BlockSpec((1, Cout_p), lambda n, l: (0, 0)),                  # b2
            pl.BlockSpec((Cin_p, Cout_p), lambda n, l: (0, 0)),              # downsample w
            pl.BlockSpec((1, Cout_p), lambda n, l: (0, 0)),                  # downsample b
            pl.BlockSpec(memory_space=pltpu.MemorySpace.SMEM),               # PReLU slopes
        ],
        out_specs=[
            pl.BlockSpec((NB, TL, Cout_p), lambda n, l: (n, l, 0)),
            pl.BlockSpec((NB, TL, Cout_p), lambda n, l: (n, l, 0)),
        ],
        compiler_params=pltpu.CompilerParams(
            dimension_semantics=("parallel", "parallel"),
            vmem_limit_bytes=32 * 1024 * 1024,   # fits v7x's 64 MiB physical VMEM
        ),
    )(x_tiles, w1, b1, w2, b2, wd, bd, slopes)

    out = jnp.transpose(out_p[:N, :L, :Cout], (0, 2, 1))
    y = jnp.transpose(y_p[:N, :L, :Cout], (0, 2, 1))
    return out, y


def init_params(key, n_inputs, n_outputs, kernel_size):
    """Deterministic synthetic params. Applies weight_norm (w = g * v / ||v||_{Cin,K})."""
    keys = jax.random.split(key, 8)

    def wn(v, g):
        norm = jnp.sqrt(jnp.sum(v * v, axis=(1, 2), keepdims=True))
        return g[:, None, None] * v / norm

    v1 = jax.random.normal(keys[0], (n_outputs, n_inputs, kernel_size), jnp.float32) * 0.3
    g1 = jax.random.normal(keys[1], (n_outputs,), jnp.float32) * 0.5 + 1.0
    w1 = wn(v1, g1)                                              # torch (Cout, Cin, K)
    b1 = jax.random.normal(keys[2], (n_outputs,), jnp.float32) * 0.1

    v2 = jax.random.normal(keys[3], (n_outputs, n_outputs, kernel_size), jnp.float32) * 0.3
    g2 = jax.random.normal(keys[4], (n_outputs,), jnp.float32) * 0.5 + 1.0
    w2 = wn(v2, g2)
    b2 = jax.random.normal(keys[5], (n_outputs,), jnp.float32) * 0.1

    if n_inputs != n_outputs:
        wd = jax.random.normal(keys[6], (n_outputs, n_inputs, 1), jnp.float32) * 0.3
        bd = jax.random.normal(keys[7], (n_outputs,), jnp.float32) * 0.1
    else:   # downsample is None -> identity residual, expressed as identity 1x1 conv
        wd = jnp.eye(n_inputs, dtype=jnp.float32)[:, :, None]
        bd = jnp.zeros((n_outputs,), jnp.float32)

    a = jnp.float32(0.25)    # PyTorch PReLU default init
    return {
        "w1": jnp.transpose(w1, (2, 1, 0)),                      # (K, Cin, Cout) tap-major
        "b1": b1,
        "a1": a,
        "w2": jnp.transpose(w2, (2, 1, 0)),                      # (K, Cout, Cout)
        "b2": b2,
        "a2": a,
        "wd": jnp.transpose(wd[:, :, 0], (1, 0)),                # (Cin, Cout)
        "bd": bd,
        "a3": a,
    }


# -------------------- pure-JAX reference for verification --------------------
def _prelu(x, a):
    return jnp.where(x >= 0.0, x, a * x)


def temporal_block_reference(x_ncl, params, *, kernel_size, dilation):
    HI = jax.lax.Precision.HIGHEST
    K, d = kernel_size, dilation
    p = (K - 1) * d
    x = jnp.transpose(x_ncl, (0, 2, 1)).astype(jnp.float32)
    N, L, _ = x.shape

    def causal_conv(inp, w_kio, b):
        xp = jnp.pad(inp, ((0, 0), (p, 0), (0, 0)))
        acc = jnp.zeros((N, L, w_kio.shape[2]), jnp.float32)
        for k in range(K):
            acc = acc + jnp.einsum("nli,io->nlo", xp[:, k * d:k * d + L, :],
                                   w_kio[k], precision=HI)
        return acc + b[None, None, :]

    h1 = _prelu(causal_conv(x, params["w1"], params["b1"]), params["a1"])
    out = _prelu(causal_conv(h1, params["w2"], params["b2"]), params["a2"])
    res = jnp.einsum("nli,io->nlo", x, params["wd"], precision=HI) + params["bd"][None, None, :]
    y = _prelu(out + res, params["a3"])
    return jnp.transpose(out, (0, 2, 1)), jnp.transpose(y, (0, 2, 1))


if __name__ == "__main__":
    N, Cin, Cout, L = 2, 4, 8, 16
    K, stride, dilation = 3, 1, 2
    padding = (K - 1) * dilation          # standard causal TCN padding; Chomp1d removes it

    key = jax.random.PRNGKey(0)
    kx, kp = jax.random.split(key)
    x = jax.random.normal(kx, (N, Cin, L), jnp.float32)     # PyTorch (N, C_in, L)
    params = init_params(kp, Cin, Cout, K)

    out, y = temporal_block_forward(x, params, kernel_size=K, dilation=dilation)
    jax.block_until_ready((out, y))

    out_ref, y_ref = temporal_block_reference(x, params, kernel_size=K, dilation=dilation)
    assert out.shape == (N, Cout, L) and y.shape == (N, Cout, L)
    assert jnp.allclose(out, out_ref, atol=1e-3, rtol=1e-3)
    assert jnp.allclose(y, y_ref, atol=1e-3, rtol=1e-3)
    print("KERNEL_OK")
</pallas_src>

<mosaic_0001>
module attributes {stable_mosaic.version = 11 : i64} {
  func.func @_temporal_block_kernel(%arg0: i32, %arg1: i32, %arg2: memref<2x1x32x128xf32, #tpu.memory_space<vmem>>, %arg3: memref<384x128xf32, #tpu.memory_space<vmem>>, %arg4: memref<1x128xf32, #tpu.memory_space<vmem>>, %arg5: memref<384x128xf32, #tpu.memory_space<vmem>>, %arg6: memref<1x128xf32, #tpu.memory_space<vmem>>, %arg7: memref<128x128xf32, #tpu.memory_space<vmem>>, %arg8: memref<1x128xf32, #tpu.memory_space<vmem>>, %arg9: memref<3xf32, #tpu.memory_space<smem>>, %arg10: memref<2x16x128xf32, #tpu.memory_space<vmem>>, %arg11: memref<2x16x128xf32, #tpu.memory_space<vmem>>) attributes {dimension_semantics = [#tpu.dimension_semantics<parallel>, #tpu.dimension_semantics<parallel>], iteration_bounds = array<i64: 1, 1>, scalar_prefetch = 0 : i64, scratch_operands = 0 : i64, tpu.core_type = #tpu.core_type<tc>, window_params = [{transform_indices = @transform_0, window_bounds = array<i64: 2, 1, 32, 128>}, {pipeline_mode = #tpu.pipeline_mode<synchronous>, transform_indices = @transform_1, window_bounds = array<i64: 384, 128>}, {pipeline_mode = #tpu.pipeline_mode<synchronous>, transform_indices = @transform_2, window_bounds = array<i64: 1, 128>}, {pipeline_mode = #tpu.pipeline_mode<synchronous>, transform_indices = @transform_3, window_bounds = array<i64: 384, 128>}, {pipeline_mode = #tpu.pipeline_mode<synchronous>, transform_indices = @transform_4, window_bounds = array<i64: 1, 128>}, {pipeline_mode = #tpu.pipeline_mode<synchronous>, transform_indices = @transform_5, window_bounds = array<i64: 128, 128>}, {pipeline_mode = #tpu.pipeline_mode<synchronous>, transform_indices = @transform_6, window_bounds = array<i64: 1, 128>}, {transform_indices = @transform_7, window_bounds = array<i64: 3>}, {transform_indices = @transform_8, window_bounds = array<i64: 2, 16, 128>}, {transform_indices = @transform_9, window_bounds = array<i64: 2, 16, 128>}]} {
    %c0 = arith.constant 0 : index
    %0 = memref.load %arg9[%c0] : memref<3xf32, #tpu.memory_space<smem>>
    %c1 = arith.constant 1 : index
    %1 = memref.load %arg9[%c1] : memref<3xf32, #tpu.memory_space<smem>>
    %c2 = arith.constant 2 : index
    %2 = memref.load %arg9[%c2] : memref<3xf32, #tpu.memory_space<smem>>
    %c0_0 = arith.constant 0 : index
    %c0_1 = arith.constant 0 : index
    %c4 = arith.constant 4 : index
    %c0_2 = arith.constant 0 : index
    %3 = vector.load %arg2[%c0_0, %c0_1, %c4, %c0_2] : memref<2x1x32x128xf32, #tpu.memory_space<vmem>>, vector<2x1x24x128xf32>
    %4 = vector.shape_cast %3 : vector<2x1x24x128xf32> to vector<2x24x128xf32>
    %c0_3 = arith.constant 0 : index
    %c0_4 = arith.constant 0 : index
    %c6 = arith.constant 6 : index
    %c0_5 = arith.constant 0 : index
    %5 = vector.load %arg2[%c0_3, %c0_4, %c6, %c0_5] : memref<2x1x32x128xf32, #tpu.memory_space<vmem>>, vector<2x1x24x128xf32>
    %6 = vector.shape_cast %5 : vector<2x1x24x128xf32> to vector<2x24x128xf32>
    %c0_6 = arith.constant 0 : index
    %c0_7 = arith.constant 0 : index
    %c8 = arith.constant 8 : index
    %c0_8 = arith.constant 0 : index
    %7 = vector.load %arg2[%c0_6, %c0_7, %c8, %c0_8] : memref<2x1x32x128xf32, #tpu.memory_space<vmem>>, vector<2x1x24x128xf32>
    %8 = vector.shape_cast %7 : vector<2x1x24x128xf32> to vector<2x24x128xf32>
    %9 = tpu.concatenate %4, %6, %8 in 2 : vector<2x24x128xf32>, vector<2x24x128xf32>, vector<2x24x128xf32> -> vector<2x24x384xf32>
    %10 = vector.shape_cast %9 : vector<2x24x384xf32> to vector<48x384xf32>
    %c0_9 = arith.constant 0 : index
    %c0_10 = arith.constant 0 : index
    %11 = vector.load %arg3[%c0_9, %c0_10] : memref<384x128xf32, #tpu.memory_space<vmem>>, vector<384x128xf32>
    %cst = arith.constant dense<0.000000e+00> : vector<48x128xf32>
    %12 = tpu.matmul %10, %11, %cst {dimension_numbers = #tpu.dot_dimension_numbers<[1], [0], [0], [1], [0, 0, 1, 1], [], []>} : vector<48x384xf32>, vector<384x128xf32>, vector<48x128xf32> -> vector<48x128xf32>
    %c0_11 = arith.constant 0 : index
    %c0_12 = arith.constant 0 : index
    %13 = vector.load %arg4[%c0_11, %c0_12] : memref<1x128xf32, #tpu.memory_space<vmem>>, vector<1x128xf32>
    %14 = vector.broadcast %13 : vector<1x128xf32> to vector<48x128xf32>
    %15 = arith.addf %12, %14 : vector<48x128xf32>
    %cst_13 = arith.constant 0.000000e+00 : f32
    %16 = vector.broadcast %cst_13 : f32 to vector<48x128xf32>
    %17 = arith.cmpf oge, %15, %16 : vector<48x128xf32>
    %18 = vector.broadcast %0 : f32 to vector<48x128xf32>
    %19 = arith.mulf %18, %15 : vector<48x128xf32>
    %20 = arith.select %17, %15, %19 : vector<48x128xi1>, vector<48x128xf32>
    %21 = vector.shape_cast %20 : vector<48x128xf32> to vector<2x24x128xf32>
    %22 = tpu.iota {dimensions = array<i32: 1>} : vector<2x24x1xi32>
    %c16_i32 = arith.constant 16 : i32
    %23 = arith.muli %arg1, %c16_i32 : i32
    %c8_i32 = arith.constant 8 : i32
    %24 = arith.subi %23, %c8_i32 : i32
    %25 = vector.broadcast %24 : i32 to vector<2x24x1xi32>
    %26 = arith.addi %25, %22 : vector<2x24x1xi32>
    %c0_i32 = arith.constant 0 : i32
    %27 = vector.broadcast %c0_i32 : i32 to vector<2x24x1xi32>
    %28 = arith.cmpi sge, %26, %27 : vector<2x24x1xi32>
    %cst_14 = arith.constant 0.000000e+00 : f32
    %29 = vector.shape_cast %28 : vector<2x24x1xi1> to vector<2x24x1xi1>
    %30 = vector.broadcast %29 : vector<2x24x1xi1> to vector<2x24x128xi1>
    %31 = vector.broadcast %cst_14 : f32 to vector<2x24x128xf32>
    %32 = arith.select %30, %21, %31 : vector<2x24x128xi1>, vector<2x24x128xf32>
    %33 = vector.extract_strided_slice %32 {offsets = [0, 4, 0], sizes = [2, 16, 128], strides = [1, 1, 1]} : vector<2x24x128xf32> to vector<2x16x128xf32>
    %34 = vector.extract_strided_slice %32 {offsets = [0, 6, 0], sizes = [2, 16, 128], strides = [1, 1, 1]} : vector<2x24x128xf32> to vector<2x16x128xf32>
    %35 = vector.extract_strided_slice %32 {offsets = [0, 8, 0], sizes = [2, 16, 128], strides = [1, 1, 1]} : vector<2x24x128xf32> to vector<2x16x128xf32>
    %36 = tpu.concatenate %33, %34, %35 in 2 : vector<2x16x128xf32>, vector<2x16x128xf32>, vector<2x16x128xf32> -> vector<2x16x384xf32>
    %37 = vector.shape_cast %36 : vector<2x16x384xf32> to vector<32x384xf32>
    %c0_15 = arith.constant 0 : index
    %c0_16 = arith.constant 0 : index
    %38 = vector.load %arg5[%c0_15, %c0_16] : memref<384x128xf32, #tpu.memory_space<vmem>>, vector<384x128xf32>
    %cst_17 = arith.constant dense<0.000000e+00> : vector<32x128xf32>
    %39 = tpu.matmul %37, %38, %cst_17 {dimension_numbers = #tpu.dot_dimension_numbers<[1], [0], [0], [1], [0, 0, 1, 1], [], []>} : vector<32x384xf32>, vector<384x128xf32>, vector<32x128xf32> -> vector<32x128xf32>
    %c0_18 = arith.constant 0 : index
    %c0_19 = arith.constant 0 : index
    %40 = vector.load %arg6[%c0_18, %c0_19] : memref<1x128xf32, #tpu.memory_space<vmem>>, vector<1x128xf32>
    %41 = vector.broadcast %40 : vector<1x128xf32> to vector<32x128xf32>
    %42 = arith.addf %39, %41 : vector<32x128xf32>
    %cst_20 = arith.constant 0.000000e+00 : f32
    %43 = vector.broadcast %cst_20 : f32 to vector<32x128xf32>
    %44 = arith.cmpf oge, %42, %43 : vector<32x128xf32>
    %45 = vector.broadcast %1 : f32 to vector<32x128xf32>
    %46 = arith.mulf %45, %42 : vector<32x128xf32>
    %47 = arith.select %44, %42, %46 : vector<32x128xi1>, vector<32x128xf32>
    %48 = vector.extract_strided_slice %8 {offsets = [0, 8, 0], sizes = [2, 16, 128], strides = [1, 1, 1]} : vector<2x24x128xf32> to vector<2x16x128xf32>
    %49 = vector.shape_cast %48 : vector<2x16x128xf32> to vector<32x128xf32>
    %c0_21 = arith.constant 0 : index
    %c0_22 = arith.constant 0 : index
    %50 = vector.load %arg7[%c0_21, %c0_22] : memref<128x128xf32, #tpu.memory_space<vmem>>, vector<128x128xf32>
    %cst_23 = arith.constant dense<0.000000e+00> : vector<32x128xf32>
    %51 = tpu.matmul %49, %50, %cst_23 {dimension_numbers = #tpu.dot_dimension_numbers<[1], [0], [0], [1], [0, 0, 1, 1], [], []>} : vector<32x128xf32>, vector<128x128xf32>, vector<32x128xf32> -> vector<32x128xf32>
    %c0_24 = arith.constant 0 : index
    %c0_25 = arith.constant 0 : index
    %52 = vector.load %arg8[%c0_24, %c0_25] : memref<1x128xf32, #tpu.memory_space<vmem>>, vector<1x128xf32>
    %53 = vector.broadcast %52 : vector<1x128xf32> to vector<32x128xf32>
    %54 = arith.addf %51, %53 : vector<32x128xf32>
    %55 = arith.addf %47, %54 : vector<32x128xf32>
    %cst_26 = arith.constant 0.000000e+00 : f32
    %56 = vector.broadcast %cst_26 : f32 to vector<32x128xf32>
    %57 = arith.cmpf oge, %55, %56 : vector<32x128xf32>
    %58 = vector.broadcast %2 : f32 to vector<32x128xf32>
    %59 = arith.mulf %58, %55 : vector<32x128xf32>
    %60 = arith.select %57, %55, %59 : vector<32x128xi1>, vector<32x128xf32>
    %61 = vector.shape_cast %47 : vector<32x128xf32> to vector<2x16x128xf32>
    %c0_27 = arith.constant 0 : index
    %c0_28 = arith.constant 0 : index
    %c0_29 = arith.constant 0 : index
    %62 = vector.load %arg10[%c0_27, %c0_28, %c0_29] : memref<2x16x128xf32, #tpu.memory_space<vmem>>, vector<2x16x128xf32>
    tpu.vector_store %arg10[%c0_27, %c0_28, %c0_29], %61 {strides = array<i32>} : memref<2x16x128xf32, #tpu.memory_space<vmem>>, vector<2x16x128xf32>,
    %63 = vector.shape_cast %60 : vector<32x128xf32> to vector<2x16x128xf32>
    %c0_30 = arith.constant 0 : index
    %c0_31 = arith.constant 0 : index
    %c0_32 = arith.constant 0 : index
    %64 = vector.load %arg11[%c0_30, %c0_31, %c0_32] : memref<2x16x128xf32, #tpu.memory_space<vmem>>, vector<2x16x128xf32>
    tpu.vector_store %arg11[%c0_30, %c0_31, %c0_32], %63 {strides = array<i32>} : memref<2x16x128xf32, #tpu.memory_space<vmem>>, vector<2x16x128xf32>,
    return
  }
  func.func @transform_0(%arg0: i32, %arg1: i32) -> (i32, i32, i32, i32) {
    %c0_i32 = arith.constant 0 : i32
    %c0_i32_0 = arith.constant 0 : i32
    %c0_i32_1 = arith.constant 0 : i32
    return %arg0, %arg1, %c0_i32, %c0_i32_0 : i32, i32, i32, i32
  }
  func.func @transform_1(%arg0: i32, %arg1: i32) -> (i32, i32) {
    %c0_i32 = arith.constant 0 : i32
    %c0_i32_0 = arith.constant 0 : i32
    %c0_i32_1 = arith.constant 0 : i32
    return %c0_i32, %c0_i32_0 : i32, i32
  }
  func.func @transform_2(%arg0: i32, %arg1: i32) -> (i32, i32) {
    %c0_i32 = arith.constant 0 : i32
    %c0_i32_0 = arith.constant 0 : i32
    %c0_i32_1 = arith.constant 0 : i32
    return %c0_i32, %c0_i32_0 : i32, i32
  }
  func.func @transform_3(%arg0: i32, %arg1: i32) -> (i32, i32) {
    %c0_i32 = arith.constant 0 : i32
    %c0_i32_0 = arith.constant 0 : i32
    %c0_i32_1 = arith.constant 0 : i32
    return %c0_i32, %c0_i32_0 : i32, i32
  }
  func.func @transform_4(%arg0: i32, %arg1: i32) -> (i32, i32) {
    %c0_i32 = arith.constant 0 : i32
    %c0_i32_0 = arith.constant 0 : i32
    %c0_i32_1 = arith.constant 0 : i32
    return %c0_i32, %c0_i32_0 : i32, i32
  }
  func.func @transform_5(%arg0: i32, %arg1: i32) -> (i32, i32) {
    %c0_i32 = arith.constant 0 : i32
    %c0_i32_0 = arith.constant 0 : i32
    %c0_i32_1 = arith.constant 0 : i32
    return %c0_i32, %c0_i32_0 : i32, i32
  }
  func.func @transform_6(%arg0: i32, %arg1: i32) -> (i32, i32) {
    %c0_i32 = arith.constant 0 : i32
    %c0_i32_0 = arith.constant 0 : i32
    %c0_i32_1 = arith.constant 0 : i32
    return %c0_i32, %c0_i32_0 : i32, i32
  }
  func.func @transform_7(%arg0: i32, %arg1: i32) -> i32 {
    %c0_i32 = arith.constant 0 : i32
    %c0_i32_0 = arith.constant 0 : i32
    return %c0_i32 : i32
  }
  func.func @transform_8(%arg0: i32, %arg1: i32) -> (i32, i32, i32) {
    %c0_i32 = arith.constant 0 : i32
    %c0_i32_0 = arith.constant 0 : i32
    return %arg0, %arg1, %c0_i32 : i32, i32, i32
  }
  func.func @transform_9(%arg0: i32, %arg1: i32) -> (i32, i32, i32) {
    %c0_i32 = arith.constant 0 : i32
    %c0_i32_0 = arith.constant 0 : i32
    return %arg0, %arg1, %c0_i32 : i32, i32, i32
  }
}

</mosaic_0001>

<llo_original>
// kernel: tpu_custom_call.1
$region0: #{tpu_custom_call.1}
  #allocation0 [shape = 'u32[]', space=smem, size = 0x4, offset = 0x4, fixed_abs, tag = 'smem constant byte address 0x4 - core index']
  #allocation1 [shape = 'u32[144,128]{1,0:T(1,128)}', space=vmem, size = 0x12000, scoped, tag = 'internal scratch']
  %s0 = inlined_call_operand.hbm [shape: f32[2,1,32,128], index: 0, kind: input, shape index: {}]
  %s1 = inlined_call_operand.hbm [shape: f32[384,128], index: 1, kind: input, shape index: {}]
  %s2 = inlined_call_operand.vmem [shape: f32[1,128], index: 2, kind: input, shape index: {}]
  %s3 = inlined_call_operand.hbm [shape: f32[384,128], index: 3, kind: input, shape index: {}]
  %s4 = inlined_call_operand.vmem [shape: f32[1,128], index: 4, kind: input, shape index: {}]
  %s5 = inlined_call_operand.hbm [shape: f32[128,128], index: 5, kind: input, shape index: {}]
  %s6 = inlined_call_operand.vmem [shape: f32[1,128], index: 6, kind: input, shape index: {}]
  %s7 = inlined_call_operand.vmem [shape: f32[3], index: 7, kind: input, shape index: {}]
  %s8 = inlined_call_operand.hbm [shape: f32[2,16,128], index: 8, kind: output, shape index: {0}]
  %s9 = inlined_call_operand.hbm [shape: f32[2,16,128], index: 9, kind: output, shape index: {1}]
  %10 = xla_tuple %s8, %s9
  %s11 = sld [smem:[#allocation0]]
  $region70: #{tpu_custom_call.1} parent=0
    _
  %s13 = ssub.s32 1, %s11
  %s14 = scalar_select 0, %s13, %s11
  $region1: #{tpu_custom_call.1} parent=0
    #allocation2 [shape = 'u8[32768]{0}', space=vmem, size = 0x8000, scoped, tag = 'input window, operand 0, single buffered']
    #allocation3 [shape = 's32[1]{0}', space=sflag, size = 0x4, scoped, tag = 'scoped memory for tpu_custom_call.1']
    #allocation4 [shape = 's32[1]{0}', space=sflag, size = 0x4, scoped, tag = 'scoped memory for tpu_custom_call.1']
    #allocation5 [shape = 's32[1]{0}', space=sflag, size = 0x4, scoped, tag = 'scoped memory for tpu_custom_call.1']
    #allocation6 [shape = 'u8[196608]{0}', space=vmem, size = 0x30000, scoped, tag = 'input window, operand 1, single buffered']
    #allocation7 [shape = 's32[1]{0}', space=sflag, size = 0x4, scoped, tag = 'scoped memory for tpu_custom_call.1']
    #allocation8 [shape = 'u8[196608]{0}', space=vmem, size = 0x30000, scoped, tag = 'input window, operand 3, single buffered']
    #allocation9 [shape = 'u8[65536]{0}', space=vmem, size = 0x10000, scoped, tag = 'input window, operand 5, single buffered']
    #allocation10 [shape = 's32[1]{0}', space=sflag, size = 0x4, scoped, tag = 'scoped memory for tpu_custom_call.1']
    #allocation11 [shape = 'u8[512]{0}', space=smem, size = 0x200, scoped, tag = 'input window, operand 7, single buffered']
    #allocation12 [shape = 'u8[16384]{0}', space=vmem, size = 0x4000, scoped, tag = 'output window, operand 0, single buffered']
    #allocation13 [shape = 'u8[16384]{0}', space=vmem, size = 0x4000, scoped, tag = 'output window, operand 1, single buffered']
    #allocation14 [shape = 's32[1]{0}', space=sflag, size = 0x4, scoped, tag = 'scoped memory for tpu_custom_call.1']
    %15 = vsyncpa [#allocation3], 0
    %16 = vsyncpa [#allocation7], 0
    %17 = vsyncpa [#allocation10], 0
    %18 = vsyncpa [#allocation5], 0
    %19 = vsyncpa [#allocation4], 0
    %20 = vsyncpa [#allocation14], 0
    // Predicated region
    $region2: #{tpu_custom_call.1} parent=1 // pred_check
      _
    $region3: #{tpu_custom_call.1} parent=1 // pred_check_branch
      %22 = sbr.rel (0) target = $region5
    $region4: #{tpu_custom_call.1} parent=1 // pred_region
      %s24 = ssub.s32 1024, 1024
      %25 = vsyncadd [#allocation3], %s24
      %s26 = sshll.u32 [#allocation2], 4
      %s27 = int_to_ptr.vmem [resolvable:$true] %s26
      %32 = dma.hbm_to_vmem [thread:$0]  %s0, 1024, %s27, [#allocation3], 128, 128, 8
    $region5: #{tpu_custom_call.1} parent=1 // pred_fallthru
      _
    // Predicated region
    $region6: #{tpu_custom_call.1} parent=1 // pred_check
      _
    $region7: #{tpu_custom_call.1} parent=1 // pred_check_branch
      %34 = sbr.rel (0) target = $region9
    $region8: #{tpu_custom_call.1} parent=1 // pred_region
      %s36 = ssub.s32 6144, 6144
      %37 = vsyncadd [#allocation7], %s36
      %s38 = sshll.u32 [#allocation6], 4
      %s39 = int_to_ptr.vmem [resolvable:$true] %s38
      %44 = dma.hbm_to_vmem [thread:$0]  %s1, 6144, %s39, [#allocation7], 128, 128, 8
    $region9: #{tpu_custom_call.1} parent=1 // pred_fallthru
      _
    // Predicated region
    $region10: #{tpu_custom_call.1} parent=1 // pred_check
      _
    $region11: #{tpu_custom_call.1} parent=1 // pred_check_branch
      %46 = sbr.rel (0) target = $region13
    $region12: #{tpu_custom_call.1} parent=1 // pred_region
      _
    $region13: #{tpu_custom_call.1} parent=1 // pred_fallthru
      _
    // Predicated region
    $region14: #{tpu_custom_call.1} parent=1 // pred_check
      _
    $region15: #{tpu_custom_call.1} parent=1 // pred_check_branch
      %48 = sbr.rel (0) target = $region17
    $region16: #{tpu_custom_call.1} parent=1 // pred_region
      %s50 = ssub.s32 6144, 6144
      %51 = vsyncadd [#allocation7], %s50
      %s52 = sshll.u32 [#allocation8], 4
      %s53 = int_to_ptr.vmem [resolvable:$true] %s52
      %58 = dma.hbm_to_vmem [thread:$0]  %s3, 6144, %s53, [#allocation7], 128, 128, 8
    $region17: #{tpu_custom_call.1} parent=1 // pred_fallthru
      _
    // Predicated region
    $region18: #{tpu_custom_call.1} parent=1 // pred_check
      _
    $region19: #{tpu_custom_call.1} parent=1 // pred_check_branch
      %60 = sbr.rel (0) target = $region21
    $region20: #{tpu_custom_call.1} parent=1 // pred_region
      _
    $region21: #{tpu_custom_call.1} parent=1 // pred_fallthru
      _
    // Predicated region
    $region22: #{tpu_custom_call.1} parent=1 // pred_check
      _
    $region23: #{tpu_custom_call.1} parent=1 // pred_check_branch
      %62 = sbr.rel (0) target = $region25
    $region24: #{tpu_custom_call.1} parent=1 // pred_region
      %s64 = ssub.s32 2048, 2048
      %65 = vsyncadd [#allocation10], %s64
      %s66 = sshll.u32 [#allocation9], 4
      %s67 = int_to_ptr.vmem [resolvable:$true] %s66
      %72 = dma.hbm_to_vmem [thread:$0]  %s5, 2048, %s67, [#allocation10], 128, 128, 8
    $region25: #{tpu_custom_call.1} parent=1 // pred_fallthru
      _
    // Predicated region
    $region26: #{tpu_custom_call.1} parent=1 // pred_check
      _
    $region27: #{tpu_custom_call.1} parent=1 // pred_check_branch
      %74 = sbr.rel (0) target = $region29
    $region28: #{tpu_custom_call.1} parent=1 // pred_region
      _
    $region29: #{tpu_custom_call.1} parent=1 // pred_fallthru
      _
    // Predicated region
    $region30: #{tpu_custom_call.1} parent=1 // pred_check
      _
    $region31: #{tpu_custom_call.1} parent=1 // pred_check_branch
      %76 = sbr.rel (0) target = $region33
    $region32: #{tpu_custom_call.1} parent=1 // pred_region
      %s78 = ssub.s32 16, 16
      %79 = vsyncadd [#allocation5], %s78
      %s81 = sshll.u32 %s7, 4
      %s82 = int_to_ptr.vmem [resolvable:$true] %s81
      %84 = dma.vmem_to_smem %s82, 16, [#allocation11], [#allocation5]
    $region33: #{tpu_custom_call.1} parent=1 // pred_fallthru
      _
    // Predicated region
    $region34: #{tpu_custom_call.1} parent=1 // pred_check
      _
    $region35: #{tpu_custom_call.1} parent=1 // pred_check_branch
      %86 = sbr.rel (0) target = $region37
    $region36: #{tpu_custom_call.1} parent=1 // pred_region
      %87 = dma.done [#allocation3], 1024
    $region37: #{tpu_custom_call.1} parent=1 // pred_fallthru
      _
    // Predicated region
    $region38: #{tpu_custom_call.1} parent=1 // pred_check
      _
    $region39: #{tpu_custom_call.1} parent=1 // pred_check_branch
      %89 = sbr.rel (0) target = $region41
    $region40: #{tpu_custom_call.1} parent=1 // pred_region
      %90 = dma.done [#allocation7], 6144
    $region41: #{tpu_custom_call.1} parent=1 // pred_fallthru
      _
    // Predicated region
    $region42: #{tpu_custom_call.1} parent=1 // pred_check
      _
    $region43: #{tpu_custom_call.1} parent=1 // pred_check_branch
      %92 = sbr.rel (0) target = $region45
    $region44: #{tpu_custom_call.1} parent=1 // pred_region
      %93 = dma.done [#allocation7], 6144
    $region45: #{tpu_custom_call.1} parent=1 // pred_fallthru
      _
    // Predicated region
    $region46: #{tpu_custom_call.1} parent=1 // pred_check
      _
    $region47: #{tpu_custom_call.1} parent=1 // pred_check_branch
      %95 = sbr.rel (0) target = $region49
    $region48: #{tpu_custom_call.1} parent=1 // pred_region
      %96 = dma.done [#allocation10], 2048
    $region49: #{tpu_custom_call.1} parent=1 // pred_fallthru
      _
    // Predicated region
    $region50: #{tpu_custom_call.1} parent=1 // pred_check
      _
    $region51: #{tpu_custom_call.1} parent=1 // pred_check_branch
      %98 = sbr.rel (0) target = $region53
    $region52: #{tpu_custom_call.1} parent=1 // pred_region
      %99 = dma.done [#allocation5], 16
    $region53: #{tpu_custom_call.1} parent=1 // pred_fallthru
      _
    %100 = sfence
    %s101 = sld [smem:[#allocation11]]
    %s102 = sld [smem:[#allocation11 + $0x1]]
    %s103 = sld [smem:[#allocation11 + $0x2]]
    %v104 = vld [vmem:[#allocation2 + $0x4] sm:$0xff]
    %v105 = vld [vmem:[#allocation2 + $0xc] sm:$0xff]
    %v106 = vld [vmem:[#allocation2 + $0x14] sm:$0xff]
    %v107 = vld [vmem:[#allocation2 + $0x24] sm:$0xff]
    %v108 = vld [vmem:[#allocation2 + $0x2c] sm:$0xff]
    %v109 = vld [vmem:[#allocation2 + $0x34] sm:$0xff]
    %v110 = vld [vmem:[#allocation2 + $0x6] sm:$0xff]
    %v111 = vld [vmem:[#allocation2 + $0xe] sm:$0xff]
    %v112 = vld [vmem:[#allocation2 + $0x16] sm:$0xff]
    %v113 = vld [vmem:[#allocation2 + $0x26] sm:$0xff]
    %v114 = vld [vmem:[#allocation2 + $0x2e] sm:$0xff]
    %v115 = vld [vmem:[#allocation2 + $0x36] sm:$0xff]
    %v116 = vld [vmem:[#allocation2 + $0x8] sm:$0xff]
    %v117 = vld [vmem:[#allocation2 + $0x10] sm:$0xff]
    %v118 = vld [vmem:[#allocation2 + $0x18] sm:$0xff]
    %v119 = vld [vmem:[#allocation2 + $0x28] sm:$0xff]
    %v120 = vld [vmem:[#allocation2 + $0x30] sm:$0xff]
    %v121 = vld [vmem:[#allocation2 + $0x38] sm:$0xff]
    %v122 = vld [vmem:[#allocation6] sm:$0xff]
    %v123 = vld [vmem:[#allocation6 + $0x8] sm:$0xff]
    %v124 = vld [vmem:[#allocation6 + $0x10] sm:$0xff]
    %v125 = vld [vmem:[#allocation6 + $0x18] sm:$0xff]
    %v126 = vld [vmem:[#allocation6 + $0x20] sm:$0xff]
    %v127 = vld [vmem:[#allocation6 + $0x28] sm:$0xff]
    %v128 = vld [vmem:[#allocation6 + $0x30] sm:$0xff]
    %v129 = vld [vmem:[#allocation6 + $0x38] sm:$0xff]
    %v130 = vld [vmem:[#allocation6 + $0x40] sm:$0xff]
    %v131 = vld [vmem:[#allocation6 + $0x48] sm:$0xff]
    %v132 = vld [vmem:[#allocation6 + $0x50] sm:$0xff]
    %v133 = vld [vmem:[#allocation6 + $0x58] sm:$0xff]
    %v134 = vld [vmem:[#allocation6 + $0x60] sm:$0xff]
    %v135 = vld [vmem:[#allocation6 + $0x68] sm:$0xff]
    %v136 = vld [vmem:[#allocation6 + $0x70] sm:$0xff]
    %v137 = vld [vmem:[#allocation6 + $0x78] sm:$0xff]
    %v138 = vld [vmem:[#allocation6 + $0x80] sm:$0xff]
    %v139 = vld [vmem:[#allocation6 + $0x88] sm:$0xff]
    %v140 = vld [vmem:[#allocation6 + $0x90] sm:$0xff]
    %v141 = vld [vmem:[#allocation6 + $0x98] sm:$0xff]
    %v142 = vld [vmem:[#allocation6 + $0xa0] sm:$0xff]
    %v143 = vld [vmem:[#allocation6 + $0xa8] sm:$0xff]
    %v144 = vld [vmem:[#allocation6 + $0xb0] sm:$0xff]
    %v145 = vld [vmem:[#allocation6 + $0xb8] sm:$0xff]
    %v146 = vld [vmem:[#allocation6 + $0xc0] sm:$0xff]
    %v147 = vld [vmem:[#allocation6 + $0xc8] sm:$0xff]
    %v148 = vld [vmem:[#allocation6 + $0xd0] sm:$0xff]
    %v149 = vld [vmem:[#allocation6 + $0xd8] sm:$0xff]
    %v150 = vld [vmem:[#allocation6 + $0xe0] sm:$0xff]
    %v151 = vld [vmem:[#allocation6 + $0xe8] sm:$0xff]
    %v152 = vld [vmem:[#allocation6 + $0xf0] sm:$0xff]
    %v153 = vld [vmem:[#allocation6 + $0xf8] sm:$0xff]
    %v154 = vld [vmem:[#allocation6 + $0x100] sm:$0xff]
    %v155 = vld [vmem:[#allocation6 + $0x108] sm:$0xff]
    %v156 = vld [vmem:[#allocation6 + $0x110] sm:$0xff]
    %v157 = vld [vmem:[#allocation6 + $0x118] sm:$0xff]
    %v158 = vld [vmem:[#allocation6 + $0x120] sm:$0xff]
    %v159 = vld [vmem:[#allocation6 + $0x128] sm:$0xff]
    %v160 = vld [vmem:[#allocation6 + $0x130] sm:$0xff]
    %v161 = vld [vmem:[#allocation6 + $0x138] sm:$0xff]
    %v162 = vld [vmem:[#allocation6 + $0x140] sm:$0xff]
    %v163 = vld [vmem:[#allocation6 + $0x148] sm:$0xff]
    %v164 = vld [vmem:[#allocation6 + $0x150] sm:$0xff]
    %v165 = vld [vmem:[#allocation6 + $0x158] sm:$0xff]
    %v166 = vld [vmem:[#allocation6 + $0x160] sm:$0xff]
    %v167 = vld [vmem:[#allocation6 + $0x168] sm:$0xff]
    %v168 = vld [vmem:[#allocation6 + $0x170] sm:$0xff]
    %v169 = vld [vmem:[#allocation6 + $0x178] sm:$0xff]
    %v170 = vld [vmem:[%s2] sm:$0x1]
    %v172 = vlaneseq
    %v173 = vshrl.u32 %v172, 7
    %v174 = vsub.s32 0, %v173
    %v175 = vrot.slane %v170, %v174
    %177 = vmatprep.subr.mxu0 0.0
    %178 = vmatpush1.msra.mxu0 %v122
    %179 = vmatprep.subr.mxu0 0.0
    %180 = vmatpush1.msra.mxu0 %v123
    %181 = vmatprep.subr.mxu0 0.0
    %182 = vmatpush1.msra.mxu0 %v124
    %183 = vmatprep.subr.mxu0 0.0
    %184 = vmatpush1.msra.mxu0 %v125
    %185 = vmatprep.subr.mxu0 0.0
    %186 = vmatpush1.msra.mxu0 %v126
    %187 = vmatprep.subr.mxu0 0.0
    %188 = vmatpush1.msra.mxu0 %v127
    %189 = vmatprep.subr.mxu0 0.0
    %190 = vmatpush1.msra.mxu0 %v128
    %191 = vmatprep.subr.mxu0 0.0
    %192 = vmatpush1.msra.mxu0 %v129
    %193 = vmatprep.subr.mxu0 0.0
    %194 = vmatpush1.msra.mxu0 %v130
    %195 = vmatprep.subr.mxu0 0.0
    %196 = vmatpush1.msra.mxu0 %v131
    %197 = vmatprep.subr.mxu0 0.0
    %198 = vmatpush1.msra.mxu0 %v132
    %199 = vmatprep.subr.mxu0 0.0
    %200 = vmatpush1.msra.mxu0 %v133
    %201 = vmatprep.subr.mxu0 0.0
    %202 = vmatpush1.msra.mxu0 %v134
    %203 = vmatprep.subr.mxu0 0.0
    %204 = vmatpush1.msra.mxu0 %v135
    %205 = vmatprep.subr.mxu0 0.0
    %206 = vmatpush1.msra.mxu0 %v136
    %207 = vmatprep.subr.mxu0 0.0
    %208 = vmatpush1.msra.mxu0 %v137
    %209 = vmatprep.subr.mxu0 0.0
    %210 = vmatpush1.msra.mxu0 %v138
    %211 = vmatprep.subr.mxu0 0.0
    %212 = vmatpush1.msra.mxu0 %v139
    %213 = vmatprep.subr.mxu0 0.0
    %214 = vmatpush1.msra.mxu0 %v140
    %215 = vmatprep.subr.mxu0 0.0
    %216 = vmatpush1.msra.mxu0 %v141
    %217 = vmatprep.subr.mxu0 0.0
    %218 = vmatpush1.msra.mxu0 %v142
    %219 = vmatprep.subr.mxu0 0.0
    %220 = vmatpush1.msra.mxu0 %v143
    %221 = vmatprep.subr.mxu0 0.0
    %222 = vmatpush1.msra.mxu0 %v144
    %223 = vmatprep.subr.mxu0 0.0
    %224 = vmatpush1.msra.mxu0 %v145
    %225 = vmatprep.subr.mxu0 0.0
    %226 = vmatpush1.msra.mxu0 %v146
    %227 = vmatprep.subr.mxu0 0.0
    %228 = vmatpush1.msra.mxu0 %v147
    %229 = vmatprep.subr.mxu0 0.0
    %230 = vmatpush1.msra.mxu0 %v148
    %231 = vmatprep.subr.mxu0 0.0
    %232 = vmatpush1.msra.mxu0 %v149
    %233 = vmatprep.subr.mxu0 0.0
    %234 = vmatpush1.msra.mxu0 %v150
    %235 = vmatprep.subr.mxu0 0.0
    %236 = vmatpush1.msra.mxu0 %v151
    %237 = vmatprep.subr.mxu0 0.0
    %238 = vmatpush1.msra.mxu0 %v152
    %239 = vmatprep.subr.mxu0 0.0
    %240 = vmatpush1.msra.mxu0 %v153
    %241 = vmatprep.mubr.f32.mxu0 %v110
    %242 = vmatmul.mubr.f32.gmra.mrb[0].mxu0 %v104
    %v243 = vpop.f32.mrb[0].mxu0
    %v244 = vadd.f32 %v175, %v243
    %v245 = vpop.f32.mrb[0].mxu0
    %246 = vmatprep.mubr.f32.mxu0 %v111
    %247 = vmatmul.mubr.f32.gmra.mrb[0].mxu0 %v105
    %v248 = vpop.f32.mrb[0].mxu0
    %v249 = vadd.f32 %v175, %v248
    %v250 = vpop.f32.mrb[0].mxu0
    %251 = vmatprep.mubr.f32.mxu0 %v112
    %252 = vmatmul.mubr.f32.gmra.mrb[0].mxu0 %v106
    %v253 = vpop.f32.mrb[0].mxu0
    %v254 = vadd.f32 %v175, %v253
    %v255 = vpop.f32.mrb[0].mxu0
    %256 = vmatprep.mubr.f32.mxu0 %v113
    %257 = vmatmul.mubr.f32.gmra.mrb[0].mxu0 %v107
    %v258 = vpop.f32.mrb[0].mxu0
    %v259 = vadd.f32 %v175, %v258
    %v260 = vpop.f32.mrb[0].mxu0
    %261 = vmatprep.mubr.f32.mxu0 %v114
    %262 = vmatmul.mubr.f32.gmra.mrb[0].mxu0 %v108
    %v263 = vpop.f32.mrb[0].mxu0
    %v264 = vadd.f32 %v175, %v263
    %v265 = vpop.f32.mrb[0].mxu0
    %266 = vmatprep.mubr.f32.mxu0 %v115
    %267 = vmatmul.mubr.f32.gmra.mrb[0].mxu0 %v109
    %v268 = vpop.f32.mrb[0].mxu0
    %v269 = vadd.f32 %v175, %v268
    %v270 = vpop.f32.mrb[0].mxu0
    %271 = vdwg.mxu0
    %272 = vmatprep.subr.mxu0 0.0
    %273 = vmatpush1.msra.mxu0 %v154
    %274 = vmatprep.subr.mxu0 0.0
    %275 = vmatpush1.msra.mxu0 %v155
    %276 = vmatprep.subr.mxu0 0.0
    %277 = vmatpush1.msra.mxu0 %v156
    %278 = vmatprep.subr.mxu0 0.0
    %279 = vmatpush1.msra.mxu0 %v157
    %280 = vmatprep.subr.mxu0 0.0
    %281 = vmatpush1.msra.mxu0 %v158
    %282 = vmatprep.subr.mxu0 0.0
    %283 = vmatpush1.msra.mxu0 %v159
    %284 = vmatprep.subr.mxu0 0.0
    %285 = vmatpush1.msra.mxu0 %v160
    %286 = vmatprep.subr.mxu0 0.0
    %287 = vmatpush1.msra.mxu0 %v161
    %288 = vmatprep.subr.mxu0 0.0
    %289 = vmatpush1.msra.mxu0 %v162
    %290 = vmatprep.subr.mxu0 0.0
    %291 = vmatpush1.msra.mxu0 %v163
    %292 = vmatprep.subr.mxu0 0.0
    %293 = vmatpush1.msra.mxu0 %v164
    %294 = vmatprep.subr.mxu0 0.0
    %295 = vmatpush1.msra.mxu0 %v165
    %296 = vmatprep.subr.mxu0 0.0
    %297 = vmatpush1.msra.mxu0 %v166
    %298 = vmatprep.subr.mxu0 0.0
    %299 = vmatpush1.msra.mxu0 %v167
    %300 = vmatprep.subr.mxu0 0.0
    %301 = vmatpush1.msra.mxu0 %v168
    %302 = vmatprep.subr.mxu0 0.0
    %303 = vmatpush1.msra.mxu0 %v169
    %304 = vmatprep.subr.mxu0 0.0
    %305 = vmatpush1.msra.mxu0 0.0
    %306 = vmatprep.subr.mxu0 0.0
    %307 = vmatpush1.msra.mxu0 0.0
    %308 = vmatprep.subr.mxu0 0.0
    %309 = vmatpush1.msra.mxu0 0.0
    %310 = vmatprep.subr.mxu0 0.0
    %311 = vmatpush1.msra.mxu0 0.0
    %312 = vmatprep.subr.mxu0 0.0
    %313 = vmatpush1.msra.mxu0 0.0
    %314 = vmatprep.subr.mxu0 0.0
    %315 = vmatpush1.msra.mxu0 0.0
    %316 = vmatprep.subr.mxu0 0.0
    %317 = vmatpush1.msra.mxu0 0.0
    %318 = vmatprep.subr.mxu0 0.0
    %319 = vmatpush1.msra.mxu0 0.0
    %320 = vmatprep.subr.mxu0 0.0
    %321 = vmatpush1.msra.mxu0 0.0
    %322 = vmatprep.subr.mxu0 0.0
    %323 = vmatpush1.msra.mxu0 0.0
    %324 = vmatprep.subr.mxu0 0.0
    %325 = vmatpush1.msra.mxu0 0.0
    %326 = vmatprep.subr.mxu0 0.0
    %327 = vmatpush1.msra.mxu0 0.0
    %328 = vmatprep.subr.mxu0 0.0
    %329 = vmatpush1.msra.mxu0 0.0
    %330 = vmatprep.subr.mxu0 0.0
    %331 = vmatpush1.msra.mxu0 0.0
    %332 = vmatprep.subr.mxu0 0.0
    %333 = vmatpush1.msra.mxu0 0.0
    %334 = vmatprep.subr.mxu0 0.0
    %335 = vmatpush1.msra.mxu0 0.0
    %336 = vmatprep.mubr.f32.mxu0 0.0
    %337 = vmatmul.mubr.f32.gmra.mrb[0].mxu0 %v116
    %v338 = vpop.f32.mrb[0].mxu0
    %v339 = vadd.f32 %v244, %v338
    %v340 = vpop.f32.mrb[0].mxu0
    %341 = vmatprep.mubr.f32.mxu0 0.0
    %342 = vmatmul.mubr.f32.gmra.mrb[0].mxu0 %v117
    %v343 = vpop.f32.mrb[0].mxu0
    %v344 = vadd.f32 %v249, %v343
    %v345 = vpop.f32.mrb[0].mxu0
    %346 = vmatprep.mubr.f32.mxu0 0.0
    %347 = vmatmul.mubr.f32.gmra.mrb[0].mxu0 %v118
    %v348 = vpop.f32.mrb[0].mxu0
    %v349 = vadd.f32 %v254, %v348
    %v350 = vpop.f32.mrb[0].mxu0
    %351 = vmatprep.mubr.f32.mxu0 0.0
    %352 = vmatmul.mubr.f32.gmra.mrb[0].mxu0 %v119
    %v353 = vpop.f32.mrb[0].mxu0
    %v354 = vadd.f32 %v259, %v353
    %v355 = vpop.f32.mrb[0].mxu0
    %356 = vmatprep.mubr.f32.mxu0 0.0
    %357 = vmatmul.mubr.f32.gmra.mrb[0].mxu0 %v120
    %v358 = vpop.f32.mrb[0].mxu0
    %v359 = vadd.f32 %v264, %v358
    %v360 = vpop.f32.mrb[0].mxu0
    %361 = vmatprep.mubr.f32.mxu0 0.0
    %362 = vmatmul.mubr.f32.gmra.mrb[0].mxu0 %v121
    %v363 = vpop.f32.mrb[0].mxu0
    %v364 = vadd.f32 %v269, %v363
    %v365 = vpop.f32.mrb[0].mxu0
    %366 = vdwg.mxu0
    %vm367 = vcmp.ge.f32.partialorder %v339, 0.0
    %vm368 = vcmp.ge.f32.partialorder %v344, 0.0
    %vm369 = vcmp.ge.f32.partialorder %v349, 0.0
    %vm370 = vcmp.ge.f32.partialorder %v354, 0.0
    %vm371 = vcmp.ge.f32.partialorder %v359, 0.0
    %vm372 = vcmp.ge.f32.partialorder %v364, 0.0
    %v373 = vstv %s101
    %v374 = vmul.f32 %v373, %v339
    %v375 = vmul.f32 %v373, %v344
    %v376 = vmul.f32 %v373, %v349
    %v377 = vmul.f32 %v373, %v354
    %v378 = vmul.f32 %v373, %v359
    %v379 = vmul.f32 %v373, %v364
    %v380 = vsel %vm367, %v339, %v374
    %v381 = vsel %vm368, %v344, %v375
    %v382 = vsel %vm369, %v349, %v376
    %v383 = vsel %vm370, %v354, %v377
    %v384 = vsel %vm371, %v359, %v378
    %v385 = vsel %vm372, %v364, %v379
    %v386 = vlaneseq
    %v387 = vshrl.u32 %v386, 7
    %v388 = vadd.s32 %v387, 8
    %v389 = vadd.s32 %v387, 16
    %s390 = smul.u32 0, 16
    %s391 = ssub.s32 %s390, 8
    %v392 = vstv %s391
    %v393 = vadd.s32 %v392, %v387
    %v394 = vadd.s32 %v392, %v388
    %v395 = vadd.s32 %v392, %v389
    %vm396 = vcmp.ge.s32.totalorder %v393, 0
    %vm397 = vcmp.ge.s32.totalorder %v394, 0
    %vm398 = vcmp.ge.s32.totalorder %v395, 0
    %v399 = vsel %vm396, 1, 0
    %v400 = vsel %vm397, 1, 0
    %v401 = vsel %vm398, 1, 0
    %vm402 = vcmp.eq.s32.totalorder %v399, 1
    %vm403 = vcmp.eq.s32.totalorder %v400, 1
    %vm404 = vcmp.eq.s32.totalorder %v401, 1
    %v405 = vsel %vm402, %v380, 0.0
    %v406 = vsel %vm403, %v381, 0.0
    %v407 = vsel %vm404, %v382, 0.0
    %v408 = vsel %vm402, %v383, 0.0
    %v409 = vsel %vm403, %v384, 0.0
    %v410 = vsel %vm404, %v385, 0.0
    %vm417 = vcmask 1045504
    %v418 = vrot.slane %v405, 2
    %v419 = vrot.slane %v406, 2
    %v420 = vsel %vm417, %v418, %v419
    %v421 = vrot.slane %v407, 2
    %v422 = vsel %vm417, %v419, %v421
    %v423 = vrot.slane %v408, 2
    %v424 = vrot.slane %v409, 2
    %v425 = vsel %vm417, %v423, %v424
    %v426 = vrot.slane %v410, 2
    %v427 = vsel %vm417, %v424, %v426
    %vm428 = vcmask 1043456
    %v429 = vrot.slane %v406, 4
    %v430 = vrot.slane %v407, 4
    %v431 = vsel %vm428, %v429, %v430
    %v432 = vrot.slane %v409, 4
    %v433 = vrot.slane %v410, 4
    %v434 = vsel %vm428, %v432, %v433
    %v435 = vrot.slane %v405, 4
    %v436 = vsel %vm428, %v435, %v429
    %v437 = vrot.slane %v420, 4
    %v438 = vrot.slane %v422, 4
    %v439 = vsel %vm428, %v437, %v438
    %v440 = vrot.slane %v429, 4
    %v441 = vrot.slane %v431, 4
    %v442 = vsel %vm428, %v440, %v441
    %v443 = vrot.slane %v421, 4
    %v444 = vsel %vm428, %v438, %v443
    %v445 = vrot.slane %v430, 4
    %v446 = vsel %vm428, %v441, %v445
    %v447 = vrot.slane %v408, 4
    %v448 = vsel %vm428, %v447, %v432
    %v449 = vrot.slane %v425, 4
    %v450 = vrot.slane %v427, 4
    %v451 = vsel %vm428, %v449, %v450
    %v452 = vrot.slane %v432, 4
    %v453 = vrot.slane %v434, 4
    %v454 = vsel %vm428, %v452, %v453
    %v455 = vrot.slane %v426, 4
    %v456 = vsel %vm428, %v450, %v455
    %v457 = vrot.slane %v433, 4
    %v458 = vsel %vm428, %v453, %v457
    %v471 = vld [vmem:[#allocation8] sm:$0xff]
    %v472 = vld [vmem:[#allocation8 + $0x8] sm:$0xff]
    %v473 = vld [vmem:[#allocation8 + $0x10] sm:$0xff]
    %v474 = vld [vmem:[#allocation8 + $0x18] sm:$0xff]
    %v475 = vld [vmem:[#allocation8 + $0x20] sm:$0xff]
    %v476 = vld [vmem:[#allocation8 + $0x28] sm:$0xff]
    %v477 = vld [vmem:[#allocation8 + $0x30] sm:$0xff]
    %v478 = vld [vmem:[#allocation8 + $0x38] sm:$0xff]
    %v479 = vld [vmem:[#allocation8 + $0x40] sm:$0xff]
    %v480 = vld [vmem:[#allocation8 + $0x48] sm:$0xff]
    %v481 = vld [vmem:[#allocation8 + $0x50] sm:$0xff]
    %v482 = vld [vmem:[#allocation8 + $0x58] sm:$0xff]
    %v483 = vld [vmem:[#allocation8 + $0x60] sm:$0xff]
    %v484 = vld [vmem:[#allocation8 + $0x68] sm:$0xff]
    %v485 = vld [vmem:[#allocation8 + $0x70] sm:$0xff]
    %v486 = vld [vmem:[#allocation8 + $0x78] sm:$0xff]
    %v487 = vld [vmem:[#allocation8 + $0x80] sm:$0xff]
    %v488 = vld [vmem:[#allocation8 + $0x88] sm:$0xff]
    %v489 = vld [vmem:[#allocation8 + $0x90] sm:$0xff]
    %v490 = vld [vmem:[#allocation8 + $0x98] sm:$0xff]
    %v491 = vld [vmem:[#allocation8 + $0xa0] sm:$0xff]
    %v492 = vld [vmem:[#allocation8 + $0xa8] sm:$0xff]
    %v493 = vld [vmem:[#allocation8 + $0xb0] sm:$0xff]
    %v494 = vld [vmem:[#allocation8 + $0xb8] sm:$0xff]
    %v495 = vld [vmem:[#allocation8 + $0xc0] sm:$0xff]
    %v496 = vld [vmem:[#allocation8 + $0xc8] sm:$0xff]
    %v497 = vld [vmem:[#allocation8 + $0xd0] sm:$0xff]
    %v498 = vld [vmem:[#allocation8 + $0xd8] sm:$0xff]
    %v499 = vld [vmem:[#allocation8 + $0xe0] sm:$0xff]
    %v500 = vld [vmem:[#allocation8 + $0xe8] sm:$0xff]
    %v501 = vld [vmem:[#allocation8 + $0xf0] sm:$0xff]
    %v502 = vld [vmem:[#allocation8 + $0xf8] sm:$0xff]
    %v503 = vld [vmem:[#allocation8 + $0x100] sm:$0xff]
    %v504 = vld [vmem:[#allocation8 + $0x108] sm:$0xff]
    %v505 = vld [vmem:[#allocation8 + $0x110] sm:$0xff]
    %v506 = vld [vmem:[#allocation8 + $0x118] sm:$0xff]
    %v507 = vld [vmem:[#allocation8 + $0x120] sm:$0xff]
    %v508 = vld [vmem:[#allocation8 + $0x128] sm:$0xff]
    %v509 = vld [vmem:[#allocation8 + $0x130] sm:$0xff]
    %v510 = vld [vmem:[#allocation8 + $0x138] sm:$0xff]
    %v511 = vld [vmem:[#allocation8 + $0x140] sm:$0xff]
    %v512 = vld [vmem:[#allocation8 + $0x148] sm:$0xff]
    %v513 = vld [vmem:[#allocation8 + $0x150] sm:$0xff]
    %v514 = vld [vmem:[#allocation8 + $0x158] sm:$0xff]
    %v515 = vld [vmem:[#allocation8 + $0x160] sm:$0xff]
    %v516 = vld [vmem:[#allocation8 + $0x168] sm:$0xff]
    %v517 = vld [vmem:[#allocation8 + $0x170] sm:$0xff]
    %v518 = vld [vmem:[#allocation8 + $0x178] sm:$0xff]
    %v519 = vld [vmem:[%s4] sm:$0x1]
    %v521 = vlaneseq
    %v522 = vshrl.u32 %v521, 7
    %v523 = vsub.s32 0, %v522
    %v524 = vrot.slane %v519, %v523
    %526 = vmatprep.subr.mxu0 0.0
    %527 = vmatpush1.msra.mxu0 %v471
    %528 = vmatprep.subr.mxu0 0.0
    %529 = vmatpush1.msra.mxu0 %v472
    %530 = vmatprep.subr.mxu0 0.0
    %531 = vmatpush1.msra.mxu0 %v473
    %532 = vmatprep.subr.mxu0 0.0
    %533 = vmatpush1.msra.mxu0 %v474
    %534 = vmatprep.subr.mxu0 0.0
    %535 = vmatpush1.msra.mxu0 %v475
    %536 = vmatprep.subr.mxu0 0.0
    %537 = vmatpush1.msra.mxu0 %v476
    %538 = vmatprep.subr.mxu0 0.0
    %539 = vmatpush1.msra.mxu0 %v477
    %540 = vmatprep.subr.mxu0 0.0
    %541 = vmatpush1.msra.mxu0 %v478
    %542 = vmatprep.subr.mxu0 0.0
    %543 = vmatpush1.msra.mxu0 %v479
    %544 = vmatprep.subr.mxu0 0.0
    %545 = vmatpush1.msra.mxu0 %v480
    %546 = vmatprep.subr.mxu0 0.0
    %547 = vmatpush1.msra.mxu0 %v481
    %548 = vmatprep.subr.mxu0 0.0
    %549 = vmatpush1.msra.mxu0 %v482
    %550 = vmatprep.subr.mxu0 0.0
    %551 = vmatpush1.msra.mxu0 %v483
    %552 = vmatprep.subr.mxu0 0.0
    %553 = vmatpush1.msra.mxu0 %v484
    %554 = vmatprep.subr.mxu0 0.0
    %555 = vmatpush1.msra.mxu0 %v485
    %556 = vmatprep.subr.mxu0 0.0
    %557 = vmatpush1.msra.mxu0 %v486
    %558 = vmatprep.subr.mxu0 0.0
    %559 = vmatpush1.msra.mxu0 %v487
    %560 = vmatprep.subr.mxu0 0.0
    %561 = vmatpush1.msra.mxu0 %v488
    %562 = vmatprep.subr.mxu0 0.0
    %563 = vmatpush1.msra.mxu0 %v489
    %564 = vmatprep.subr.mxu0 0.0
    %565 = vmatpush1.msra.mxu0 %v490
    %566 = vmatprep.subr.mxu0 0.0
    %567 = vmatpush1.msra.mxu0 %v491
    %568 = vmatprep.subr.mxu0 0.0
    %569 = vmatpush1.msra.mxu0 %v492
    %570 = vmatprep.subr.mxu0 0.0
    %571 = vmatpush1.msra.mxu0 %v493
    %572 = vmatprep.subr.mxu0 0.0
    %573 = vmatpush1.msra.mxu0 %v494
    %574 = vmatprep.subr.mxu0 0.0
    %575 = vmatpush1.msra.mxu0 %v495
    %576 = vmatprep.subr.mxu0 0.0
    %577 = vmatpush1.msra.mxu0 %v496
    %578 = vmatprep.subr.mxu0 0.0
    %579 = vmatpush1.msra.mxu0 %v497
    %580 = vmatprep.subr.mxu0 0.0
    %581 = vmatpush1.msra.mxu0 %v498
    %582 = vmatprep.subr.mxu0 0.0
    %583 = vmatpush1.msra.mxu0 %v499
    %584 = vmatprep.subr.mxu0 0.0
    %585 = vmatpush1.msra.mxu0 %v500
    %586 = vmatprep.subr.mxu0 0.0
    %587 = vmatpush1.msra.mxu0 %v501
    %588 = vmatprep.subr.mxu0 0.0
    %589 = vmatpush1.msra.mxu0 %v502
    %590 = vmatprep.mubr.f32.mxu0 %v439
    %591 = vmatmul.mubr.f32.gmra.mrb[0].mxu0 %v436
    %v592 = vpop.f32.mrb[0].mxu0
    %v593 = vadd.f32 %v524, %v592
    %v594 = vpop.f32.mrb[0].mxu0
    %595 = vmatprep.mubr.f32.mxu0 %v444
    %596 = vmatmul.mubr.f32.gmra.mrb[0].mxu0 %v431
    %v597 = vpop.f32.mrb[0].mxu0
    %v598 = vadd.f32 %v524, %v597
    %v599 = vpop.f32.mrb[0].mxu0
    %600 = vmatprep.mubr.f32.mxu0 %v451
    %601 = vmatmul.mubr.f32.gmra.mrb[0].mxu0 %v448
    %v602 = vpop.f32.mrb[0].mxu0
    %v603 = vadd.f32 %v524, %v602
    %v604 = vpop.f32.mrb[0].mxu0
    %605 = vmatprep.mubr.f32.mxu0 %v456
    %606 = vmatmul.mubr.f32.gmra.mrb[0].mxu0 %v434
    %v607 = vpop.f32.mrb[0].mxu0
    %v608 = vadd.f32 %v524, %v607
    %v609 = vpop.f32.mrb[0].mxu0
    %610 = vdwg.mxu0
    %611 = vmatprep.subr.mxu0 0.0
    %612 = vmatpush1.msra.mxu0 %v503
    %613 = vmatprep.subr.mxu0 0.0
    %614 = vmatpush1.msra.mxu0 %v504
    %615 = vmatprep.subr.mxu0 0.0
    %616 = vmatpush1.msra.mxu0 %v505
    %617 = vmatprep.subr.mxu0 0.0
    %618 = vmatpush1.msra.mxu0 %v506
    %619 = vmatprep.subr.mxu0 0.0
    %620 = vmatpush1.msra.mxu0 %v507
    %621 = vmatprep.subr.mxu0 0.0
    %622 = vmatpush1.msra.mxu0 %v508
    %623 = vmatprep.subr.mxu0 0.0
    %624 = vmatpush1.msra.mxu0 %v509
    %625 = vmatprep.subr.mxu0 0.0
    %626 = vmatpush1.msra.mxu0 %v510
    %627 = vmatprep.subr.mxu0 0.0
    %628 = vmatpush1.msra.mxu0 %v511
    %629 = vmatprep.subr.mxu0 0.0
    %630 = vmatpush1.msra.mxu0 %v512
    %631 = vmatprep.subr.mxu0 0.0
    %632 = vmatpush1.msra.mxu0 %v513
    %633 = vmatprep.subr.mxu0 0.0
    %634 = vmatpush1.msra.mxu0 %v514
    %635 = vmatprep.subr.mxu0 0.0
    %636 = vmatpush1.msra.mxu0 %v515
    %637 = vmatprep.subr.mxu0 0.0
    %638 = vmatpush1.msra.mxu0 %v516
    %639 = vmatprep.subr.mxu0 0.0
    %640 = vmatpush1.msra.mxu0 %v517
    %641 = vmatprep.subr.mxu0 0.0
    %642 = vmatpush1.msra.mxu0 %v518
    %643 = vmatprep.subr.mxu0 0.0
    %644 = vmatpush1.msra.mxu0 0.0
    %645 = vmatprep.subr.mxu0 0.0
    %646 = vmatpush1.msra.mxu0 0.0
    %647 = vmatprep.subr.mxu0 0.0
    %648 = vmatpush1.msra.mxu0 0.0
    %649 = vmatprep.subr.mxu0 0.0
    %650 = vmatpush1.msra.mxu0 0.0
    %651 = vmatprep.subr.mxu0 0.0
    %652 = vmatpush1.msra.mxu0 0.0
    %653 = vmatprep.subr.mxu0 0.0
    %654 = vmatpush1.msra.mxu0 0.0
    %655 = vmatprep.subr.mxu0 0.0
    %656 = vmatpush1.msra.mxu0 0.0
    %657 = vmatprep.subr.mxu0 0.0
    %658 = vmatpush1.msra.mxu0 0.0
    %659 = vmatprep.subr.mxu0 0.0
    %660 = vmatpush1.msra.mxu0 0.0
    %661 = vmatprep.subr.mxu0 0.0
    %662 = vmatpush1.msra.mxu0 0.0
    %663 = vmatprep.subr.mxu0 0.0
    %664 = vmatpush1.msra.mxu0 0.0
    %665 = vmatprep.subr.mxu0 0.0
    %666 = vmatpush1.msra.mxu0 0.0
    %667 = vmatprep.subr.mxu0 0.0
    %668 = vmatpush1.msra.mxu0 0.0
    %669 = vmatprep.subr.mxu0 0.0
    %670 = vmatpush1.msra.mxu0 0.0
    %671 = vmatprep.subr.mxu0 0.0
    %672 = vmatpush1.msra.mxu0 0.0
    %673 = vmatprep.subr.mxu0 0.0
    %674 = vmatpush1.msra.mxu0 0.0
    %675 = vmatprep.mubr.f32.mxu0 0.0
    %676 = vmatmul.mubr.f32.gmra.mrb[0].mxu0 %v442
    %v677 = vpop.f32.mrb[0].mxu0
    %v678 = vadd.f32 %v593, %v677
    %v679 = vpop.f32.mrb[0].mxu0
    %680 = vmatprep.mubr.f32.mxu0 0.0
    %681 = vmatmul.mubr.f32.gmra.mrb[0].mxu0 %v446
    %v682 = vpop.f32.mrb[0].mxu0
    %v683 = vadd.f32 %v598, %v682
    %v684 = vpop.f32.mrb[0].mxu0
    %685 = vmatprep.mubr.f32.mxu0 0.0
    %686 = vmatmul.mubr.f32.gmra.mrb[0].mxu0 %v454
    %v687 = vpop.f32.mrb[0].mxu0
    %v688 = vadd.f32 %v603, %v687
    %v689 = vpop.f32.mrb[0].mxu0
    %690 = vmatprep.mubr.f32.mxu0 0.0
    %691 = vmatmul.mubr.f32.gmra.mrb[0].mxu0 %v458
    %v692 = vpop.f32.mrb[0].mxu0
    %v693 = vadd.f32 %v608, %v692
    %v694 = vpop.f32.mrb[0].mxu0
    %695 = vdwg.mxu0
    %vm696 = vcmp.ge.f32.partialorder %v678, 0.0
    %vm697 = vcmp.ge.f32.partialorder %v683, 0.0
    %vm698 = vcmp.ge.f32.partialorder %v688, 0.0
    %vm699 = vcmp.ge.f32.partialorder %v693, 0.0
    %v700 = vstv %s102
    %v701 = vmul.f32 %v700, %v678
    %v702 = vmul.f32 %v700, %v683
    %v703 = vmul.f32 %v700, %v688
    %v704 = vmul.f32 %v700, %v693
    %v705 = vsel %vm696, %v678, %v701
    %v706 = vsel %vm697, %v683, %v702
    %v707 = vsel %vm698, %v688, %v703
    %v708 = vsel %vm699, %v693, %v704
    %v709 = vld [vmem:[#allocation9] sm:$0xff]
    %v710 = vld [vmem:[#allocation9 + $0x8] sm:$0xff]
    %v711 = vld [vmem:[#allocation9 + $0x10] sm:$0xff]
    %v712 = vld [vmem:[#allocation9 + $0x18] sm:$0xff]
    %v713 = vld [vmem:[#allocation9 + $0x20] sm:$0xff]
    %v714 = vld [vmem:[#allocation9 + $0x28] sm:$0xff]
    %v715 = vld [vmem:[#allocation9 + $0x30] sm:$0xff]
    %v716 = vld [vmem:[#allocation9 + $0x38] sm:$0xff]
    %v717 = vld [vmem:[#allocation9 + $0x40] sm:$0xff]
    %v718 = vld [vmem:[#allocation9 + $0x48] sm:$0xff]
    %v719 = vld [vmem:[#allocation9 + $0x50] sm:$0xff]
    %v720 = vld [vmem:[#allocation9 + $0x58] sm:$0xff]
    %v721 = vld [vmem:[#allocation9 + $0x60] sm:$0xff]
    %v722 = vld [vmem:[#allocation9 + $0x68] sm:$0xff]
    %v723 = vld [vmem:[#allocation9 + $0x70] sm:$0xff]
    %v724 = vld [vmem:[#allocation9 + $0x78] sm:$0xff]
    %v725 = vld [vmem:[%s6] sm:$0x1]
    %v727 = vlaneseq
    %v728 = vshrl.u32 %v727, 7
    %v729 = vsub.s32 0, %v728
    %v730 = vrot.slane %v725, %v729
    %732 = vmatprep.subr.mxu0 0.0
    %733 = vmatpush1.msra.mxu0 %v709
    %734 = vmatprep.subr.mxu0 0.0
    %735 = vmatpush1.msra.mxu0 %v710
    %736 = vmatprep.subr.mxu0 0.0
    %737 = vmatpush1.msra.mxu0 %v711
    %738 = vmatprep.subr.mxu0 0.0
    %739 = vmatpush1.msra.mxu0 %v712
    %740 = vmatprep.subr.mxu0 0.0
    %741 = vmatpush1.msra.mxu0 %v713
    %742 = vmatprep.subr.mxu0 0.0
    %743 = vmatpush1.msra.mxu0 %v714
    %744 = vmatprep.subr.mxu0 0.0
    %745 = vmatpush1.msra.mxu0 %v715
    %746 = vmatprep.subr.mxu0 0.0
    %747 = vmatpush1.msra.mxu0 %v716
    %748 = vmatprep.subr.mxu0 0.0
    %749 = vmatpush1.msra.mxu0 %v717
    %750 = vmatprep.subr.mxu0 0.0
    %751 = vmatpush1.msra.mxu0 %v718
    %752 = vmatprep.subr.mxu0 0.0
    %753 = vmatpush1.msra.mxu0 %v719
    %754 = vmatprep.subr.mxu0 0.0
    %755 = vmatpush1.msra.mxu0 %v720
    %756 = vmatprep.subr.mxu0 0.0
    %757 = vmatpush1.msra.mxu0 %v721
    %758 = vmatprep.subr.mxu0 0.0
    %759 = vmatpush1.msra.mxu0 %v722
    %760 = vmatprep.subr.mxu0 0.0
    %761 = vmatpush1.msra.mxu0 %v723
    %762 = vmatprep.subr.mxu0 0.0
    %763 = vmatpush1.msra.mxu0 %v724
    %764 = vmatprep.subr.mxu0 0.0
    %765 = vmatpush1.msra.mxu0 0.0
    %766 = vmatprep.subr.mxu0 0.0
    %767 = vmatpush1.msra.mxu0 0.0
    %768 = vmatprep.subr.mxu0 0.0
    %769 = vmatpush1.msra.mxu0 0.0
    %770 = vmatprep.subr.mxu0 0.0
    %771 = vmatpush1.msra.mxu0 0.0
    %772 = vmatprep.subr.mxu0 0.0
    %773 = vmatpush1.msra.mxu0 0.0
    %774 = vmatprep.subr.mxu0 0.0
    %775 = vmatpush1.msra.mxu0 0.0
    %776 = vmatprep.subr.mxu0 0.0
    %777 = vmatpush1.msra.mxu0 0.0
    %778 = vmatprep.subr.mxu0 0.0
    %779 = vmatpush1.msra.mxu0 0.0
    %780 = vmatprep.subr.mxu0 0.0
    %781 = vmatpush1.msra.mxu0 0.0
    %782 = vmatprep.subr.mxu0 0.0
    %783 = vmatpush1.msra.mxu0 0.0
    %784 = vmatprep.subr.mxu0 0.0
    %785 = vmatpush1.msra.mxu0 0.0
    %786 = vmatprep.subr.mxu0 0.0
    %787 = vmatpush1.msra.mxu0 0.0
    %788 = vmatprep.subr.mxu0 0.0
    %789 = vmatpush1.msra.mxu0 0.0
    %790 = vmatprep.subr.mxu0 0.0
    %791 = vmatpush1.msra.mxu0 0.0
    %792 = vmatprep.subr.mxu0 0.0
    %793 = vmatpush1.msra.mxu0 0.0
    %794 = vmatprep.subr.mxu0 0.0
    %795 = vmatpush1.msra.mxu0 0.0
    %796 = vmatprep.mubr.f32.mxu0 0.0
    %797 = vmatmul.mubr.f32.gmra.mrb[0].mxu0 %v117
    %v798 = vpop.f32.mrb[0].mxu0
    %v799 = vadd.f32 %v730, %v798
    %v800 = vpop.f32.mrb[0].mxu0
    %801 = vmatprep.mubr.f32.mxu0 0.0
    %802 = vmatmul.mubr.f32.gmra.mrb[0].mxu0 %v118
    %v803 = vpop.f32.mrb[0].mxu0
    %v804 = vadd.f32 %v730, %v803
    %v805 = vpop.f32.mrb[0].mxu0
    %806 = vmatprep.mubr.f32.mxu0 0.0
    %807 = vmatmul.mubr.f32.gmra.mrb[0].mxu0 %v120
    %v808 = vpop.f32.mrb[0].mxu0
    %v809 = vadd.f32 %v730, %v808
    %v810 = vpop.f32.mrb[0].mxu0
    %811 = vmatprep.mubr.f32.mxu0 0.0
    %812 = vmatmul.mubr.f32.gmra.mrb[0].mxu0 %v121
    %v813 = vpop.f32.mrb[0].mxu0
    %v814 = vadd.f32 %v730, %v813
    %v815 = vpop.f32.mrb[0].mxu0
    %816 = vdwg.mxu0
    %v817 = vadd.f32 %v705, %v799
    %v818 = vadd.f32 %v706, %v804
    %v819 = vadd.f32 %v707, %v809
    %v820 = vadd.f32 %v708, %v814
    %vm821 = vcmp.ge.f32.partialorder %v817, 0.0
    %vm822 = vcmp.ge.f32.partialorder %v818, 0.0
    %vm823 = vcmp.ge.f32.partialorder %v819, 0.0
    %vm824 = vcmp.ge.f32.partialorder %v820, 0.0
    %v825 = vstv %s103
    %v826 = vmul.f32 %v825, %v817
    %v827 = vmul.f32 %v825, %v818
    %v828 = vmul.f32 %v825, %v819
    %v829 = vmul.f32 %v825, %v820
    %v830 = vsel %vm821, %v817, %v826
    %v831 = vsel %vm822, %v818, %v827
    %v832 = vsel %vm823, %v819, %v828
    %v833 = vsel %vm824, %v820, %v829
    %834 = vst [vmem:[#allocation12] sm:$0xff] %v705
    %835 = vst [vmem:[#allocation12 + $0x8] sm:$0xff] %v706
    %836 = vst [vmem:[#allocation12 + $0x10] sm:$0xff] %v707
    %837 = vst [vmem:[#allocation12 + $0x18] sm:$0xff] %v708
    %838 = vst [vmem:[#allocation13] sm:$0xff] %v830
    %839 = vst [vmem:[#allocation13 + $0x8] sm:$0xff] %v831
    %840 = vst [vmem:[#allocation13 + $0x10] sm:$0xff] %v832
    %841 = vst [vmem:[#allocation13 + $0x18] sm:$0xff] %v833
    // Predicated region
    $region54: #{tpu_custom_call.1} parent=1 // pred_check
      _
    $region55: #{tpu_custom_call.1} parent=1 // pred_check_branch
      %843 = sbr.rel (0) target = $region57
    $region56: #{tpu_custom_call.1} parent=1 // pred_region
      %s845 = ssub.s32 512, 512
      %846 = vsyncadd [#allocation4], %s845
      %s847 = sshll.u32 [#allocation12], 4
      %s848 = int_to_ptr.vmem [resolvable:$true] %s847
      %853 = dma.vmem_to_hbm [thread:$0]  %s848, 512, %s8, [#allocation4], 128, 128, 8
    $region57: #{tpu_custom_call.1} parent=1 // pred_fallthru
      _
    // Predicated region
    $region58: #{tpu_custom_call.1} parent=1 // pred_check
      _
    $region59: #{tpu_custom_call.1} parent=1 // pred_check_branch
      %855 = sbr.rel (0) target = $region61
    $region60: #{tpu_custom_call.1} parent=1 // pred_region
      %s857 = ssub.s32 512, 512
      %858 = vsyncadd [#allocation14], %s857
      %s859 = sshll.u32 [#allocation13], 4
      %s860 = int_to_ptr.vmem [resolvable:$true] %s859
      %865 = dma.vmem_to_hbm [thread:$0]  %s860, 512, %s9, [#allocation14], 128, 128, 8
    $region61: #{tpu_custom_call.1} parent=1 // pred_fallthru
      _
    // Predicated region
    $region62: #{tpu_custom_call.1} parent=1 // pred_check
      _
    $region63: #{tpu_custom_call.1} parent=1 // pred_check_branch
      %867 = sbr.rel (0) target = $region65
    $region64: #{tpu_custom_call.1} parent=1 // pred_region
      %868 = dma.done [#allocation4], 512
    $region65: #{tpu_custom_call.1} parent=1 // pred_fallthru
      _
    // Predicated region
    $region66: #{tpu_custom_call.1} parent=1 // pred_check
      _
    $region67: #{tpu_custom_call.1} parent=1 // pred_check_branch
      %870 = sbr.rel (0) target = $region69
    $region68: #{tpu_custom_call.1} parent=1 // pred_region
      %871 = dma.done [#allocation14], 512
    $region69: #{tpu_custom_call.1} parent=1 // pred_fallthru
      _
    %872 = vsyncpa [#allocation3], 1
    %873 = vsyncpa [#allocation7], 1
    %874 = vsyncpa [#allocation10], 1
    %875 = vsyncpa [#allocation4], 1
    %876 = vsyncpa [#allocation14], 1
    %877 = vsyncpa [#allocation5], 1

</llo_original>
